<compile_context>
chip_gen: v7x
topology: tpu7x:2x2x1
jax: 0.10.0
libtpu: 0.0.40
codegen_flags: <defaults>
</compile_context>

<pallas_src>
import jax
import jax.numpy as jnp
from jax.experimental import pallas as pl
from jax.experimental.pallas import tpu as pltpu

BN_EPS = 1e-5


# ---------------------------------------------------------------------------
# Kernel: one batch tile per grid step. All tensors are (features, batch).
# ---------------------------------------------------------------------------
def nfm_kernel(embed_ref, lin_ref, w1_ref, b1_ref, w2_ref, b2_ref, w3_ref, out_ref):
    # embed_ref: (F, D, TB) bf16 -> upcast once, keep every elementwise op in f32.
    x = embed_ref[...].astype(jnp.float32)

    # Bi-Interaction pooling: 0.5 * ((sum_f x)^2 - sum_f x^2).
    # Reduction over F is over the leading dim -> plain VPU adds of (D, TB) slabs.
    s = jnp.sum(x, axis=0)                               # (D, TB)
    bi = 0.5 * (s * s - jnp.sum(x * x, axis=0))          # (D, TB)

    # DNN layer 1 (Linear with BN folded in) + ReLU.
    h = jnp.dot(w1_ref[...], bi, preferred_element_type=jnp.float32) + b1_ref[...]
    h = jnp.maximum(h, 0.0)                              # (h1, TB)

    # DNN layer 2 (Linear with BN folded in) + ReLU.
    h = jnp.dot(w2_ref[...], h, preferred_element_type=jnp.float32) + b2_ref[...]
    h = jnp.maximum(h, 0.0)                              # (h2, TB)

    # Final projection -> lane-dense (1, TB) logit row; b3 is folded into lin_ref.
    logit = jnp.dot(w3_ref[...], h, preferred_element_type=jnp.float32)  # (1, TB)
    out_ref[...] = jax.nn.sigmoid(lin_ref[...] + logit)


# ---------------------------------------------------------------------------
# Wrapper: BN/bias folding, batch-on-lanes transpose, batch-tiled pallas_call.
# ---------------------------------------------------------------------------
def _fold_bn(w, b, g, beta, m, v):
    """Fold eval-mode BatchNorm into the preceding Linear (exact in inference)."""
    scale = g * jax.lax.rsqrt(v + BN_EPS)                # (1, h)
    return w * scale, (b - m) * scale + beta             # (in, h), (1, h)


def _pick_block(batch, max_tb=4096):
    """Pick a batch tile. VMEM use per step is tiny (TB*F*D*2 B bf16, double
    buffered), so even v7x's 64 MiB is never the constraint here; the goal is
    amortizing the ~0.35 us per-grid-step overhead."""
    if batch <= max_tb:
        return batch
    for tb in (4096, 2048, 1024, 512, 256, 128):
        if tb <= max_tb and batch % tb == 0:
            return tb
    # TODO(synk): pad ragged batches to a multiple of 128 instead of one big tile.
    return batch


def nfm_forward(embed, lin_logits, params, *, block_b=None):
    """embed: (B, F, D) f32; lin_logits: (B, 1) f32; returns sigmoid logits (B, 1)."""
    B, F, D = embed.shape

    # Fold BN + biases into the linear layers (wrapper-side, exact in eval mode).
    w1f, b1f = _fold_bn(params["w1"], params["b1"], params["g1"],
                        params["beta1"], params["m1"], params["v1"])
    w2f, b2f = _fold_bn(params["w2"], params["b2"], params["g2"],
                        params["beta2"], params["m2"], params["v2"])
    w1t = w1f.T                                          # (h1, D)
    b1t = b1f.reshape(-1, 1)                             # (h1, 1)
    w2t = w2f.T                                          # (h2, h1)
    b2t = b2f.reshape(-1, 1)                             # (h2, 1)
    w3t = params["w3"].T                                 # (1, h2)

    # Fold the final bias into the linear-model logits; batch -> lanes.
    lin_t = lin_logits.reshape(1, B) + params["b3"].reshape(1, 1)    # (1, B) f32

    # Batch-on-lanes layout, bf16 storage for the dominant HBM stream.
    embed_t = jnp.transpose(embed, (1, 2, 0)).astype(jnp.bfloat16)   # (F, D, B)

    tb = block_b if block_b is not None else _pick_block(B)
    assert B % tb == 0, "batch must be divisible by the batch tile"
    grid = (B // tb,)

    def _full(a):
        # Whole-array block, same index every step -> fetched once, kept in VMEM.
        return pl.BlockSpec(a.shape, lambda i, _nd=a.ndim: (0,) * _nd)

    out_t = pl.pallas_call(
        nfm_kernel,
        out_shape=jax.ShapeDtypeStruct((1, B), jnp.float32),
        grid=grid,
        in_specs=[
            pl.BlockSpec((F, D, tb), lambda i: (0, 0, i)),   # embed tile
            pl.BlockSpec((1, tb), lambda i: (0, i)),         # linear-model logits
            _full(w1t), _full(b1t), _full(w2t), _full(b2t), _full(w3t),
        ],
        out_specs=pl.BlockSpec((1, tb), lambda i: (0, i)),
        compiler_params=pltpu.CompilerParams(
            dimension_semantics=("parallel",),               # megacore on v7x
        ),
    )(embed_t, lin_t, w1t, b1t, w2t, b2t, w3t)

    return out_t.T                                           # (B, 1)


# ---------------------------------------------------------------------------
# Pure-JAX reference (unfolded BN, original layout) for sanity checking.
# ---------------------------------------------------------------------------
def reference_forward(embed, lin_logits, params):
    s = jnp.sum(embed, axis=1)
    bi = 0.5 * (s * s - jnp.sum(embed * embed, axis=1))
    h = bi @ params["w1"] + params["b1"]
    h = params["g1"] * (h - params["m1"]) * jax.lax.rsqrt(params["v1"] + BN_EPS) + params["beta1"]
    h = jnp.maximum(h, 0.0)
    h = h @ params["w2"] + params["b2"]
    h = params["g2"] * (h - params["m2"]) * jax.lax.rsqrt(params["v2"] + BN_EPS) + params["beta2"]
    h = jnp.maximum(h, 0.0)
    logits = lin_logits + h @ params["w3"] + params["b3"]
    return jax.nn.sigmoid(logits)


if __name__ == "__main__":
    key = jax.random.PRNGKey(0)

    # ----- model config (small shapes) -----
    feature_metas = [10, 20, 30, 40]      # vocab size per sparse field
    num_fields = len(feature_metas)
    embedding_dim = 8
    hidden_units = (32, 16)

    keys = jax.random.split(key, 32)

    # ----- LinearModel: per-field scalar weight tables (dim-1 embeddings), no bias -----
    lin_tables = [0.05 * jax.random.normal(keys[i], (v, 1), jnp.float32)
                  for i, v in enumerate(feature_metas)]
    # ----- GroupEmbedding: per-field (vocab, D) tables -----
    emb_tables = [0.1 * jax.random.normal(keys[4 + i], (v, embedding_dim), jnp.float32)
                  for i, v in enumerate(feature_metas)]

    # ----- MLP([D, 32, 16]) with BN(eval)+ReLU, plus final projection to 1 logit -----
    h1, h2 = hidden_units
    params = {
        "w1": 0.1 * jax.random.normal(keys[12], (embedding_dim, h1), jnp.float32),
        "b1": jnp.zeros((1, h1), jnp.float32),
        "g1": jnp.ones((1, h1), jnp.float32),
        "beta1": jnp.zeros((1, h1), jnp.float32),
        "m1": jnp.zeros((1, h1), jnp.float32),
        "v1": jnp.ones((1, h1), jnp.float32),
        "w2": 0.1 * jax.random.normal(keys[13], (h1, h2), jnp.float32),
        "b2": jnp.zeros((1, h2), jnp.float32),
        "g2": jnp.ones((1, h2), jnp.float32),
        "beta2": jnp.zeros((1, h2), jnp.float32),
        "m2": jnp.zeros((1, h2), jnp.float32),
        "v2": jnp.ones((1, h2), jnp.float32),
        "w3": 0.1 * jax.random.normal(keys[14], (h2, 1), jnp.float32),
        "b3": jnp.zeros((1, 1), jnp.float32),
    }

    def make_batch(batch, key_off):
        idx = jnp.stack(
            [jax.random.randint(keys[key_off + i], (batch,), 0, v)
             for i, v in enumerate(feature_metas)],
            axis=1,
        )  # (B, F) int32
        lin = sum(lin_tables[f][idx[:, f]] for f in range(num_fields))            # (B, 1)
        emb = jnp.stack([emb_tables[f][idx[:, f]] for f in range(num_fields)], 1)  # (B, F, D)
        return emb, lin

    # Case 1: tiny batch (single grid step).  Case 2: 256 rows with TB=128 ->
    # 2-step grid exercising the double-buffered batch pipeline.
    for batch, key_off, blk in ((8, 16, None), (256, 20, 128)):
        embed, lin_logits = make_batch(batch, key_off)
        out = jax.block_until_ready(nfm_forward(embed, lin_logits, params, block_b=blk))

        # Reference sees the same bf16-rounded embeddings the kernel DMAs.
        embed_q = embed.astype(jnp.bfloat16).astype(jnp.float32)
        ref = reference_forward(embed_q, lin_logits, params)

        assert out.shape == (batch, 1)
        assert jnp.allclose(out, ref, atol=2e-5, rtol=1e-4), "mismatch vs JAX reference"

    print("KERNEL_OK")
</pallas_src>

<mosaic_0001>
module attributes {stable_mosaic.version = 11 : i64} {
  func.func @nfm_kernel(%arg0: i32, %arg1: memref<4x8x8xbf16, #tpu.memory_space<vmem>>, %arg2: memref<1x8xf32, #tpu.memory_space<vmem>>, %arg3: memref<32x8xf32, #tpu.memory_space<vmem>>, %arg4: memref<32x1xf32, #tpu.memory_space<vmem>>, %arg5: memref<16x32xf32, #tpu.memory_space<vmem>>, %arg6: memref<16x1xf32, #tpu.memory_space<vmem>>, %arg7: memref<1x16xf32, #tpu.memory_space<vmem>>, %arg8: memref<1x8xf32, #tpu.memory_space<vmem>>) attributes {dimension_semantics = [#tpu.dimension_semantics<parallel>], iteration_bounds = array<i64: 1>, scalar_prefetch = 0 : i64, scratch_operands = 0 : i64, tpu.core_type = #tpu.core_type<tc>, window_params = [{transform_indices = @transform_0, window_bounds = array<i64: 4, 8, 8>}, {transform_indices = @transform_1, window_bounds = array<i64: 1, 8>}, {pipeline_mode = #tpu.pipeline_mode<synchronous>, transform_indices = @transform_2, window_bounds = array<i64: 32, 8>}, {pipeline_mode = #tpu.pipeline_mode<synchronous>, transform_indices = @transform_3, window_bounds = array<i64: 32, 1>}, {pipeline_mode = #tpu.pipeline_mode<synchronous>, transform_indices = @transform_4, window_bounds = array<i64: 16, 32>}, {pipeline_mode = #tpu.pipeline_mode<synchronous>, transform_indices = @transform_5, window_bounds = array<i64: 16, 1>}, {pipeline_mode = #tpu.pipeline_mode<synchronous>, transform_indices = @transform_6, window_bounds = array<i64: 1, 16>}, {transform_indices = @transform_7, window_bounds = array<i64: 1, 8>}]} {
    %c0 = arith.constant 0 : index
    %c0_0 = arith.constant 0 : index
    %c0_1 = arith.constant 0 : index
    %0 = vector.load %arg1[%c0, %c0_0, %c0_1] : memref<4x8x8xbf16, #tpu.memory_space<vmem>>, vector<4x8x8xbf16>
    %1 = arith.extf %0 : vector<4x8x8xbf16> to vector<4x8x8xf32>
    %cst = arith.constant dense<0.000000e+00> : vector<8x8xf32>
    %2 = vector.multi_reduction <add>, %1, %cst [0] : vector<4x8x8xf32> to vector<8x8xf32>
    %3 = arith.mulf %2, %2 : vector<8x8xf32>
    %4 = arith.mulf %1, %1 : vector<4x8x8xf32>
    %cst_2 = arith.constant dense<0.000000e+00> : vector<8x8xf32>
    %5 = vector.multi_reduction <add>, %4, %cst_2 [0] : vector<4x8x8xf32> to vector<8x8xf32>
    %6 = arith.subf %3, %5 : vector<8x8xf32>
    %cst_3 = arith.constant 5.000000e-01 : f32
    %7 = vector.broadcast %cst_3 : f32 to vector<8x8xf32>
    %8 = arith.mulf %7, %6 : vector<8x8xf32>
    %c0_4 = arith.constant 0 : index
    %c0_5 = arith.constant 0 : index
    %9 = vector.load %arg3[%c0_4, %c0_5] : memref<32x8xf32, #tpu.memory_space<vmem>>, vector<32x8xf32>
    %cst_6 = arith.constant dense<0.000000e+00> : vector<32x8xf32>
    %10 = tpu.matmul %9, %8, %cst_6 {dimension_numbers = #tpu.dot_dimension_numbers<[1], [0], [0], [1], [0, 0, 1, 1], [], []>} : vector<32x8xf32>, vector<8x8xf32>, vector<32x8xf32> -> vector<32x8xf32>
    %c0_7 = arith.constant 0 : index
    %c0_8 = arith.constant 0 : index
    %11 = vector.load %arg4[%c0_7, %c0_8] : memref<32x1xf32, #tpu.memory_space<vmem>>, vector<32x1xf32>
    %12 = vector.broadcast %11 : vector<32x1xf32> to vector<32x8xf32>
    %13 = arith.addf %10, %12 : vector<32x8xf32>
    %cst_9 = arith.constant 0.000000e+00 : f32
    %14 = vector.broadcast %cst_9 : f32 to vector<32x8xf32>
    %15 = arith.maximumf %13, %14 : vector<32x8xf32>
    %c0_10 = arith.constant 0 : index
    %c0_11 = arith.constant 0 : index
    %16 = vector.load %arg5[%c0_10, %c0_11] : memref<16x32xf32, #tpu.memory_space<vmem>>, vector<16x32xf32>
    %cst_12 = arith.constant dense<0.000000e+00> : vector<16x8xf32>
    %17 = tpu.matmul %16, %15, %cst_12 {dimension_numbers = #tpu.dot_dimension_numbers<[1], [0], [0], [1], [0, 0, 1, 1], [], []>} : vector<16x32xf32>, vector<32x8xf32>, vector<16x8xf32> -> vector<16x8xf32>
    %c0_13 = arith.constant 0 : index
    %c0_14 = arith.constant 0 : index
    %18 = vector.load %arg6[%c0_13, %c0_14] : memref<16x1xf32, #tpu.memory_space<vmem>>, vector<16x1xf32>
    %19 = vector.broadcast %18 : vector<16x1xf32> to vector<16x8xf32>
    %20 = arith.addf %17, %19 : vector<16x8xf32>
    %cst_15 = arith.constant 0.000000e+00 : f32
    %21 = vector.broadcast %cst_15 : f32 to vector<16x8xf32>
    %22 = arith.maximumf %20, %21 : vector<16x8xf32>
    %c0_16 = arith.constant 0 : index
    %c0_17 = arith.constant 0 : index
    %23 = vector.load %arg7[%c0_16, %c0_17] : memref<1x16xf32, #tpu.memory_space<vmem>>, vector<1x16xf32>
    %cst_18 = arith.constant dense<0.000000e+00> : vector<1x8xf32>
    %24 = tpu.matmul %23, %22, %cst_18 {dimension_numbers = #tpu.dot_dimension_numbers<[1], [0], [0], [1], [0, 0, 1, 1], [], []>} : vector<1x16xf32>, vector<16x8xf32>, vector<1x8xf32> -> vector<1x8xf32>
    %c0_19 = arith.constant 0 : index
    %c0_20 = arith.constant 0 : index
    %25 = vector.load %arg2[%c0_19, %c0_20] : memref<1x8xf32, #tpu.memory_space<vmem>>, vector<1x8xf32>
    %26 = arith.addf %25, %24 : vector<1x8xf32>
    %27 = arith.negf %26 : vector<1x8xf32>
    %28 = math.exp %27 : vector<1x8xf32>
    %cst_21 = arith.constant 1.000000e+00 : f32
    %29 = vector.broadcast %cst_21 : f32 to vector<1x8xf32>
    %30 = arith.addf %29, %28 : vector<1x8xf32>
    %31 = arith.divf %29, %30 : vector<1x8xf32>
    %c0_22 = arith.constant 0 : index
    %c0_23 = arith.constant 0 : index
    %32 = vector.load %arg8[%c0_22, %c0_23] : memref<1x8xf32, #tpu.memory_space<vmem>>, vector<1x8xf32>
    tpu.vector_store %arg8[%c0_22, %c0_23], %31 {strides = array<i32>} : memref<1x8xf32, #tpu.memory_space<vmem>>, vector<1x8xf32>,
    return
  }
  func.func @transform_0(%arg0: i32) -> (i32, i32, i32) {
    %c0_i32 = arith.constant 0 : i32
    %c0_i32_0 = arith.constant 0 : i32
    %c0_i32_1 = arith.constant 0 : i32
    return %c0_i32, %c0_i32_0, %arg0 : i32, i32, i32
  }
  func.func @transform_1(%arg0: i32) -> (i32, i32) {
    %c0_i32 = arith.constant 0 : i32
    %c0_i32_0 = arith.constant 0 : i32
    return %c0_i32, %arg0 : i32, i32
  }
  func.func @transform_2(%arg0: i32) -> (i32, i32) {
    %c0_i32 = arith.constant 0 : i32
    %c0_i32_0 = arith.constant 0 : i32
    %c0_i32_1 = arith.constant 0 : i32
    return %c0_i32, %c0_i32_0 : i32, i32
  }
  func.func @transform_3(%arg0: i32) -> (i32, i32) {
    %c0_i32 = arith.constant 0 : i32
    %c0_i32_0 = arith.constant 0 : i32
    %c0_i32_1 = arith.constant 0 : i32
    return %c0_i32, %c0_i32_0 : i32, i32
  }
  func.func @transform_4(%arg0: i32) -> (i32, i32) {
    %c0_i32 = arith.constant 0 : i32
    %c0_i32_0 = arith.constant 0 : i32
    %c0_i32_1 = arith.constant 0 : i32
    return %c0_i32, %c0_i32_0 : i32, i32
  }
  func.func @transform_5(%arg0: i32) -> (i32, i32) {
    %c0_i32 = arith.constant 0 : i32
    %c0_i32_0 = arith.constant 0 : i32
    %c0_i32_1 = arith.constant 0 : i32
    return %c0_i32, %c0_i32_0 : i32, i32
  }
  func.func @transform_6(%arg0: i32) -> (i32, i32) {
    %c0_i32 = arith.constant 0 : i32
    %c0_i32_0 = arith.constant 0 : i32
    %c0_i32_1 = arith.constant 0 : i32
    return %c0_i32, %c0_i32_0 : i32, i32
  }
  func.func @transform_7(%arg0: i32) -> (i32, i32) {
    %c0_i32 = arith.constant 0 : i32
    %c0_i32_0 = arith.constant 0 : i32
    return %c0_i32, %arg0 : i32, i32
  }
}

</mosaic_0001>

<llo_original>
// kernel: tpu_custom_call.1
$region0: #{tpu_custom_call.1}
  #allocation0 [shape = 'u32[]', space=smem, size = 0x4, offset = 0x4, fixed_abs, tag = 'smem constant byte address 0x4 - core index']
  #allocation1 [shape = 'u32[144,128]{1,0:T(1,128)}', space=vmem, size = 0x12000, scoped, tag = 'internal scratch']
  %s0 = inlined_call_operand.vmem [shape: bf16[4,8,8], index: 0, kind: input, shape index: {}]
  %s1 = inlined_call_operand.vmem [shape: f32[1,8], index: 1, kind: input, shape index: {}]
  %s2 = inlined_call_operand.vmem [shape: f32[32,8], index: 2, kind: input, shape index: {}]
  %s3 = inlined_call_operand.vmem [shape: f32[32,1], index: 3, kind: input, shape index: {}]
  %s4 = inlined_call_operand.vmem [shape: f32[16,32], index: 4, kind: input, shape index: {}]
  %s5 = inlined_call_operand.vmem [shape: f32[16,1], index: 5, kind: input, shape index: {}]
  %s6 = inlined_call_operand.vmem [shape: f32[1,16], index: 6, kind: input, shape index: {}]
  %s7 = inlined_call_operand.hbm [shape: f32[1,8], index: 7, kind: output, shape index: {}]
  %s8 = sld [smem:[#allocation0]]
  $region38: #{tpu_custom_call.1} parent=0
    _
  %s10 = ssub.s32 1, %s8
  %s11 = scalar_select 0, %s10, %s8
  $region1: #{tpu_custom_call.1} parent=0
    #allocation2 [shape = 'u8[512]{0}', space=vmem, size = 0x400, scoped, tag = 'output window, operand 0, single buffered']
    #allocation3 [shape = 's32[1]{0}', space=sflag, size = 0x4, scoped, tag = 'scoped memory for tpu_custom_call.1']
    %12 = vsyncpa [#allocation3], 0
    // Predicated region
    $region2: #{tpu_custom_call.1} parent=1 // pred_check
      _
    $region3: #{tpu_custom_call.1} parent=1 // pred_check_branch
      %14 = sbr.rel (0) target = $region5
    $region4: #{tpu_custom_call.1} parent=1 // pred_region
      _
    $region5: #{tpu_custom_call.1} parent=1 // pred_fallthru
      _
    // Predicated region
    $region6: #{tpu_custom_call.1} parent=1 // pred_check
      _
    $region7: #{tpu_custom_call.1} parent=1 // pred_check_branch
      %16 = sbr.rel (0) target = $region9
    $region8: #{tpu_custom_call.1} parent=1 // pred_region
      _
    $region9: #{tpu_custom_call.1} parent=1 // pred_fallthru
      _
    // Predicated region
    $region10: #{tpu_custom_call.1} parent=1 // pred_check
      _
    $region11: #{tpu_custom_call.1} parent=1 // pred_check_branch
      %18 = sbr.rel (0) target = $region13
    $region12: #{tpu_custom_call.1} parent=1 // pred_region
      _
    $region13: #{tpu_custom_call.1} parent=1 // pred_fallthru
      _
    // Predicated region
    $region14: #{tpu_custom_call.1} parent=1 // pred_check
      _
    $region15: #{tpu_custom_call.1} parent=1 // pred_check_branch
      %20 = sbr.rel (0) target = $region17
    $region16: #{tpu_custom_call.1} parent=1 // pred_region
      _
    $region17: #{tpu_custom_call.1} parent=1 // pred_fallthru
      _
    // Predicated region
    $region18: #{tpu_custom_call.1} parent=1 // pred_check
      _
    $region19: #{tpu_custom_call.1} parent=1 // pred_check_branch
      %22 = sbr.rel (0) target = $region21
    $region20: #{tpu_custom_call.1} parent=1 // pred_region
      _
    $region21: #{tpu_custom_call.1} parent=1 // pred_fallthru
      _
    // Predicated region
    $region22: #{tpu_custom_call.1} parent=1 // pred_check
      _
    $region23: #{tpu_custom_call.1} parent=1 // pred_check_branch
      %24 = sbr.rel (0) target = $region25
    $region24: #{tpu_custom_call.1} parent=1 // pred_region
      _
    $region25: #{tpu_custom_call.1} parent=1 // pred_fallthru
      _
    // Predicated region
    $region26: #{tpu_custom_call.1} parent=1 // pred_check
      _
    $region27: #{tpu_custom_call.1} parent=1 // pred_check_branch
      %26 = sbr.rel (0) target = $region29
    $region28: #{tpu_custom_call.1} parent=1 // pred_region
      _
    $region29: #{tpu_custom_call.1} parent=1 // pred_fallthru
      _
    %v27 = vld [vmem:[%s0] sm:$0xf]
    %v28 = vld [vmem:[%s0 + $0x4] sm:$0xf]
    %v29 = vld [vmem:[%s0 + $0x8] sm:$0xf]
    %v30 = vld [vmem:[%s0 + $0xc] sm:$0xf]
    %v31 = vunpack.c.l.bf16 %v27
    %v32 = vunpack.c.l.bf16 %v28
    %v33 = vunpack.c.l.bf16 %v29
    %v34 = vunpack.c.l.bf16 %v30
    %vm35 = vcmask 64512
    %v36 = vsel %vm35, %v31, 0.0
    %v37 = vsel %vm35, %v32, 0.0
    %v38 = vadd.f32 %v36, %v37
    %v39 = vsel %vm35, %v33, 0.0
    %v40 = vadd.f32 %v38, %v39
    %v41 = vsel %vm35, %v34, 0.0
    %v42 = vadd.f32 %v40, %v41
    %v43 = vmul.f32 %v42, %v42
    %v44 = vmul.f32 %v31, %v31
    %v45 = vmul.f32 %v32, %v32
    %v46 = vmul.f32 %v33, %v33
    %v47 = vmul.f32 %v34, %v34
    %v48 = vsel %vm35, %v44, 0.0
    %v49 = vsel %vm35, %v45, 0.0
    %v50 = vadd.f32 %v48, %v49
    %v51 = vsel %vm35, %v46, 0.0
    %v52 = vadd.f32 %v50, %v51
    %v53 = vsel %vm35, %v47, 0.0
    %v54 = vadd.f32 %v52, %v53
    %v55 = vsub.f32 %v43, %v54
    %v56 = vmul.f32 %v55, 0.5
    %v57 = vld [vmem:[%s2] sm:$0xff]
    %v58 = vld [vmem:[%s2 + $0x8] sm:$0xff]
    %v59 = vld [vmem:[%s2 + $0x10] sm:$0xff]
    %v60 = vld [vmem:[%s2 + $0x18] sm:$0xff]
    %v61 = vld [vmem:[%s3] sm:$0xff]
    %v62 = vld [vmem:[%s3 + $0x8] sm:$0xff]
    %v63 = vld [vmem:[%s3 + $0x10] sm:$0xff]
    %v64 = vld [vmem:[%s3 + $0x18] sm:$0xff]
    %66 = vset.pattern.permute.xlu0 0
    %67 = vperm.xlu0 %66, %v61
    %v68 = vpop.permute.xlu0 %67
    %71 = vset.pattern.permute.xlu0 0
    %72 = vperm.xlu0 %71, %v62
    %v73 = vpop.permute.xlu0 %72
    %76 = vset.pattern.permute.xlu0 0
    %77 = vperm.xlu0 %76, %v63
    %v78 = vpop.permute.xlu0 %77
    %81 = vset.pattern.permute.xlu0 0
    %82 = vperm.xlu0 %81, %v64
    %v83 = vpop.permute.xlu0 %82
    %v86 = vsel %vm35, %v57, 0
    %v89 = vsel %vm35, %v58, 0
    %v92 = vsel %vm35, %v59, 0
    %v95 = vsel %vm35, %v60, 0
    %97 = vmatprep.subr.mxu0 0.0
    %98 = vmatpush1.msra.mxu0 %v56
    %99 = vmatprep.subr.mxu0 0.0
    %100 = vmatpush1.msra.mxu0 0.0
    %101 = vmatprep.subr.mxu0 0.0
    %102 = vmatpush1.msra.mxu0 0.0
    %103 = vmatprep.subr.mxu0 0.0
    %104 = vmatpush1.msra.mxu0 0.0
    %105 = vmatprep.subr.mxu0 0.0
    %106 = vmatpush1.msra.mxu0 0.0
    %107 = vmatprep.subr.mxu0 0.0
    %108 = vmatpush1.msra.mxu0 0.0
    %109 = vmatprep.subr.mxu0 0.0
    %110 = vmatpush1.msra.mxu0 0.0
    %111 = vmatprep.subr.mxu0 0.0
    %112 = vmatpush1.msra.mxu0 0.0
    %113 = vmatprep.subr.mxu0 0.0
    %114 = vmatpush1.msra.mxu0 0.0
    %115 = vmatprep.subr.mxu0 0.0
    %116 = vmatpush1.msra.mxu0 0.0
    %117 = vmatprep.subr.mxu0 0.0
    %118 = vmatpush1.msra.mxu0 0.0
    %119 = vmatprep.subr.mxu0 0.0
    %120 = vmatpush1.msra.mxu0 0.0
    %121 = vmatprep.subr.mxu0 0.0
    %122 = vmatpush1.msra.mxu0 0.0
    %123 = vmatprep.subr.mxu0 0.0
    %124 = vmatpush1.msra.mxu0 0.0
    %125 = vmatprep.subr.mxu0 0.0
    %126 = vmatpush1.msra.mxu0 0.0
    %127 = vmatprep.subr.mxu0 0.0
    %128 = vmatpush1.msra.mxu0 0.0
    %129 = vmatprep.subr.mxu0 0.0
    %130 = vmatpush1.msra.mxu0 0.0
    %131 = vmatprep.subr.mxu0 0.0
    %132 = vmatpush1.msra.mxu0 0.0
    %133 = vmatprep.subr.mxu0 0.0
    %134 = vmatpush1.msra.mxu0 0.0
    %135 = vmatprep.subr.mxu0 0.0
    %136 = vmatpush1.msra.mxu0 0.0
    %137 = vmatprep.subr.mxu0 0.0
    %138 = vmatpush1.msra.mxu0 0.0
    %139 = vmatprep.subr.mxu0 0.0
    %140 = vmatpush1.msra.mxu0 0.0
    %141 = vmatprep.subr.mxu0 0.0
    %142 = vmatpush1.msra.mxu0 0.0
    %143 = vmatprep.subr.mxu0 0.0
    %144 = vmatpush1.msra.mxu0 0.0
    %145 = vmatprep.subr.mxu0 0.0
    %146 = vmatpush1.msra.mxu0 0.0
    %147 = vmatprep.subr.mxu0 0.0
    %148 = vmatpush1.msra.mxu0 0.0
    %149 = vmatprep.subr.mxu0 0.0
    %150 = vmatpush1.msra.mxu0 0.0
    %151 = vmatprep.subr.mxu0 0.0
    %152 = vmatpush1.msra.mxu0 0.0
    %153 = vmatprep.subr.mxu0 0.0
    %154 = vmatpush1.msra.mxu0 0.0
    %155 = vmatprep.subr.mxu0 0.0
    %156 = vmatpush1.msra.mxu0 0.0
    %157 = vmatprep.subr.mxu0 0.0
    %158 = vmatpush1.msra.mxu0 0.0
    %159 = vmatprep.subr.mxu0 0.0
    %160 = vmatpush1.msra.mxu0 0.0
    %161 = vmatprep.mubr.f32.mxu0 0.0
    %162 = vmatmul.mubr.f32.gmra.mrb[0].mxu0 %v86
    %v163 = vpop.f32.mrb[0].mxu0
    %v164 = vadd.f32 %v68, %v163
    %v165 = vpop.f32.mrb[0].mxu0
    %166 = vmatprep.mubr.f32.mxu0 0.0
    %167 = vmatmul.mubr.f32.gmra.mrb[0].mxu0 %v89
    %v168 = vpop.f32.mrb[0].mxu0
    %v169 = vadd.f32 %v73, %v168
    %v170 = vpop.f32.mrb[0].mxu0
    %171 = vmatprep.mubr.f32.mxu0 0.0
    %172 = vmatmul.mubr.f32.gmra.mrb[0].mxu0 %v92
    %v173 = vpop.f32.mrb[0].mxu0
    %v174 = vadd.f32 %v78, %v173
    %v175 = vpop.f32.mrb[0].mxu0
    %176 = vmatprep.mubr.f32.mxu0 0.0
    %177 = vmatmul.mubr.f32.gmra.mrb[0].mxu0 %v95
    %v178 = vpop.f32.mrb[0].mxu0
    %v179 = vadd.f32 %v83, %v178
    %v180 = vpop.f32.mrb[0].mxu0
    %181 = vdwg.mxu0
    %v182 = vmax.f32 %v164, 0.0
    %v183 = vmax.f32 %v169, 0.0
    %v184 = vmax.f32 %v174, 0.0
    %v185 = vmax.f32 %v179, 0.0
    %v186 = vld [vmem:[%s4] sm:$0xff]
    %v187 = vld [vmem:[%s4 + $0x8] sm:$0xff]
    %v188 = vld [vmem:[%s5] sm:$0xff]
    %v189 = vld [vmem:[%s5 + $0x8] sm:$0xff]
    %191 = vset.pattern.permute.xlu0 0
    %192 = vperm.xlu0 %191, %v188
    %v193 = vpop.permute.xlu0 %192
    %196 = vset.pattern.permute.xlu0 0
    %197 = vperm.xlu0 %196, %v189
    %v198 = vpop.permute.xlu0 %197
    %vm200 = vcmask 261120
    %v202 = vsel %vm200, %v186, 0
    %v205 = vsel %vm200, %v187, 0
    %207 = vmatprep.subr.mxu0 0.0
    %208 = vmatpush1.msra.mxu0 %v182
    %209 = vmatprep.subr.mxu0 0.0
    %210 = vmatpush1.msra.mxu0 %v183
    %211 = vmatprep.subr.mxu0 0.0
    %212 = vmatpush1.msra.mxu0 %v184
    %213 = vmatprep.subr.mxu0 0.0
    %214 = vmatpush1.msra.mxu0 %v185
    %215 = vmatprep.subr.mxu0 0.0
    %216 = vmatpush1.msra.mxu0 0.0
    %217 = vmatprep.subr.mxu0 0.0
    %218 = vmatpush1.msra.mxu0 0.0
    %219 = vmatprep.subr.mxu0 0.0
    %220 = vmatpush1.msra.mxu0 0.0
    %221 = vmatprep.subr.mxu0 0.0
    %222 = vmatpush1.msra.mxu0 0.0
    %223 = vmatprep.subr.mxu0 0.0
    %224 = vmatpush1.msra.mxu0 0.0
    %225 = vmatprep.subr.mxu0 0.0
    %226 = vmatpush1.msra.mxu0 0.0
    %227 = vmatprep.subr.mxu0 0.0
    %228 = vmatpush1.msra.mxu0 0.0
    %229 = vmatprep.subr.mxu0 0.0
    %230 = vmatpush1.msra.mxu0 0.0
    %231 = vmatprep.subr.mxu0 0.0
    %232 = vmatpush1.msra.mxu0 0.0
    %233 = vmatprep.subr.mxu0 0.0
    %234 = vmatpush1.msra.mxu0 0.0
    %235 = vmatprep.subr.mxu0 0.0
    %236 = vmatpush1.msra.mxu0 0.0
    %237 = vmatprep.subr.mxu0 0.0
    %238 = vmatpush1.msra.mxu0 0.0
    %239 = vmatprep.subr.mxu0 0.0
    %240 = vmatpush1.msra.mxu0 0.0
    %241 = vmatprep.subr.mxu0 0.0
    %242 = vmatpush1.msra.mxu0 0.0
    %243 = vmatprep.subr.mxu0 0.0
    %244 = vmatpush1.msra.mxu0 0.0
    %245 = vmatprep.subr.mxu0 0.0
    %246 = vmatpush1.msra.mxu0 0.0
    %247 = vmatprep.subr.mxu0 0.0
    %248 = vmatpush1.msra.mxu0 0.0
    %249 = vmatprep.subr.mxu0 0.0
    %250 = vmatpush1.msra.mxu0 0.0
    %251 = vmatprep.subr.mxu0 0.0
    %252 = vmatpush1.msra.mxu0 0.0
    %253 = vmatprep.subr.mxu0 0.0
    %254 = vmatpush1.msra.mxu0 0.0
    %255 = vmatprep.subr.mxu0 0.0
    %256 = vmatpush1.msra.mxu0 0.0
    %257 = vmatprep.subr.mxu0 0.0
    %258 = vmatpush1.msra.mxu0 0.0
    %259 = vmatprep.subr.mxu0 0.0
    %260 = vmatpush1.msra.mxu0 0.0
    %261 = vmatprep.subr.mxu0 0.0
    %262 = vmatpush1.msra.mxu0 0.0
    %263 = vmatprep.subr.mxu0 0.0
    %264 = vmatpush1.msra.mxu0 0.0
    %265 = vmatprep.subr.mxu0 0.0
    %266 = vmatpush1.msra.mxu0 0.0
    %267 = vmatprep.subr.mxu0 0.0
    %268 = vmatpush1.msra.mxu0 0.0
    %269 = vmatprep.subr.mxu0 0.0
    %270 = vmatpush1.msra.mxu0 0.0
    %271 = vmatprep.mubr.f32.mxu0 0.0
    %272 = vmatmul.mubr.f32.gmra.mrb[0].mxu0 %v202
    %v273 = vpop.f32.mrb[0].mxu0
    %v274 = vadd.f32 %v193, %v273
    %v275 = vpop.f32.mrb[0].mxu0
    %276 = vmatprep.mubr.f32.mxu0 0.0
    %277 = vmatmul.mubr.f32.gmra.mrb[0].mxu0 %v205
    %v278 = vpop.f32.mrb[0].mxu0
    %v279 = vadd.f32 %v198, %v278
    %v280 = vpop.f32.mrb[0].mxu0
    %281 = vdwg.mxu0
    %v282 = vmax.f32 %v274, 0.0
    %v283 = vmax.f32 %v279, 0.0
    %v284 = vld [vmem:[%s6] sm:$0x1]
    %vm285 = vcmask 130048
    %v287 = vsel %vm285, %v284, 0
    %289 = vmatprep.subr.mxu0 0.0
    %290 = vmatpush1.msra.mxu0 %v282
    %291 = vmatprep.subr.mxu0 0.0
    %292 = vmatpush1.msra.mxu0 %v283
    %293 = vmatprep.subr.mxu0 0.0
    %294 = vmatpush1.msra.mxu0 0.0
    %295 = vmatprep.subr.mxu0 0.0
    %296 = vmatpush1.msra.mxu0 0.0
    %297 = vmatprep.subr.mxu0 0.0
    %298 = vmatpush1.msra.mxu0 0.0
    %299 = vmatprep.subr.mxu0 0.0
    %300 = vmatpush1.msra.mxu0 0.0
    %301 = vmatprep.subr.mxu0 0.0
    %302 = vmatpush1.msra.mxu0 0.0
    %303 = vmatprep.subr.mxu0 0.0
    %304 = vmatpush1.msra.mxu0 0.0
    %305 = vmatprep.subr.mxu0 0.0
    %306 = vmatpush1.msra.mxu0 0.0
    %307 = vmatprep.subr.mxu0 0.0
    %308 = vmatpush1.msra.mxu0 0.0
    %309 = vmatprep.subr.mxu0 0.0
    %310 = vmatpush1.msra.mxu0 0.0
    %311 = vmatprep.subr.mxu0 0.0
    %312 = vmatpush1.msra.mxu0 0.0
    %313 = vmatprep.subr.mxu0 0.0
    %314 = vmatpush1.msra.mxu0 0.0
    %315 = vmatprep.subr.mxu0 0.0
    %316 = vmatpush1.msra.mxu0 0.0
    %317 = vmatprep.subr.mxu0 0.0
    %318 = vmatpush1.msra.mxu0 0.0
    %319 = vmatprep.subr.mxu0 0.0
    %320 = vmatpush1.msra.mxu0 0.0
    %321 = vmatprep.subr.mxu0 0.0
    %322 = vmatpush1.msra.mxu0 0.0
    %323 = vmatprep.subr.mxu0 0.0
    %324 = vmatpush1.msra.mxu0 0.0
    %325 = vmatprep.subr.mxu0 0.0
    %326 = vmatpush1.msra.mxu0 0.0
    %327 = vmatprep.subr.mxu0 0.0
    %328 = vmatpush1.msra.mxu0 0.0
    %329 = vmatprep.subr.mxu0 0.0
    %330 = vmatpush1.msra.mxu0 0.0
    %331 = vmatprep.subr.mxu0 0.0
    %332 = vmatpush1.msra.mxu0 0.0
    %333 = vmatprep.subr.mxu0 0.0
    %334 = vmatpush1.msra.mxu0 0.0
    %335 = vmatprep.subr.mxu0 0.0
    %336 = vmatpush1.msra.mxu0 0.0
    %337 = vmatprep.subr.mxu0 0.0
    %338 = vmatpush1.msra.mxu0 0.0
    %339 = vmatprep.subr.mxu0 0.0
    %340 = vmatpush1.msra.mxu0 0.0
    %341 = vmatprep.subr.mxu0 0.0
    %342 = vmatpush1.msra.mxu0 0.0
    %343 = vmatprep.subr.mxu0 0.0
    %344 = vmatpush1.msra.mxu0 0.0
    %345 = vmatprep.subr.mxu0 0.0
    %346 = vmatpush1.msra.mxu0 0.0
    %347 = vmatprep.subr.mxu0 0.0
    %348 = vmatpush1.msra.mxu0 0.0
    %349 = vmatprep.subr.mxu0 0.0
    %350 = vmatpush1.msra.mxu0 0.0
    %351 = vmatprep.subr.mxu0 0.0
    %352 = vmatpush1.msra.mxu0 0.0
    %353 = vmatprep.mubr.f32.mxu0 0.0
    %354 = vmatmul.mubr.f32.gmra.mrb[0].mxu0 %v287
    %v355 = vpop.f32.mrb[0].mxu0
    %v356 = vadd.f32 0.0, %v355
    %v357 = vpop.f32.mrb[0].mxu0
    %358 = vdwg.mxu0
    %v359 = vld [vmem:[%s1] sm:$0x1]
    %v360 = vadd.f32 %v359, %v356
    %v361 = vxor.u32 %v360, 2147483648
    %v362 = vmul.f32 %v361, 1.442695
    %v363 = vpow.pop %v362
    %v364 = vadd.f32 %v363, 1.0
    %v365 = vrcp.pop %v364
    %v366 = vmul.f32 1.0, %v365
    %vm367 = vcmask 57344
    %368 = vst.msk [vmem:[#allocation2] sm:$0x1] %vm367, %v366
    // Predicated region
    $region30: #{tpu_custom_call.1} parent=1 // pred_check
      _
    $region31: #{tpu_custom_call.1} parent=1 // pred_check_branch
      %370 = sbr.rel (0) target = $region33
    $region32: #{tpu_custom_call.1} parent=1 // pred_region
      %s372 = ssub.s32 16, 16
      %373 = vsyncadd [#allocation3], %s372
      %s375 = sshll.u32 [#allocation2], 4
      %s376 = int_to_ptr.vmem [resolvable:$true] %s375
      %378 = dma.vmem_to_hbm [thread:$0]  %s376, 16, %s7, [#allocation3]
    $region33: #{tpu_custom_call.1} parent=1 // pred_fallthru
      _
    // Predicated region
    $region34: #{tpu_custom_call.1} parent=1 // pred_check
      _
    $region35: #{tpu_custom_call.1} parent=1 // pred_check_branch
      %380 = sbr.rel (0) target = $region37
    $region36: #{tpu_custom_call.1} parent=1 // pred_region
      %381 = dma.done [#allocation3], 16
    $region37: #{tpu_custom_call.1} parent=1 // pred_fallthru
      _
    %382 = vsyncpa [#allocation3], 1

</llo_original>
